<compile_context>
chip_gen: v5e
topology: v5e:2x2
jax: 0.10.0
libtpu: 0.0.40
codegen_flags: <defaults>
</compile_context>

<pallas_src>
import math

import jax
import jax.numpy as jnp
from jax.experimental import pallas as pl
from jax.experimental.pallas import tpu as pltpu


_VMEM_LIMIT_BYTES = 48 * 1024 * 1024   # fits v7x 64 MiB physical; raises v5e/v6e defaults
_TARGET_BLOCK_ELEMS = 1024 * 1024      # ~4 MiB of f32 per block
_MAX_MATMUL_DIM = 1024                 # dense (dim, dim) rotation matrix cap (4 MiB f32)


def _pick_tile_rows(num_rows, row_width):
    """Rows per block: ~4 MiB-f32 blocks, multiple of 8, >=4 grid steps when possible."""
    tile = max(8, (_TARGET_BLOCK_ELEMS // row_width) // 8 * 8)
    if num_rows >= 32:
        # Keep at least 4 grid steps so the 2 v7x TensorCores both get work.
        tile = min(tile, max(8, (num_rows // 4) // 8 * 8))
    if tile >= num_rows:
        return num_rows
    return tile


# ----------------------------------------------------------------------------
# Kernel 1: lane-dense interleaved Givens rotation
#   coef : (3, W) f32 rows = (a, be, bo)
#   y[j] = a[j]*x[j] + be[j]*x[j+1] + bo[j]*x[j-1]
#   (roll wrap-around values always hit a zero coefficient)
# ----------------------------------------------------------------------------
def _rotation_lane_kernel(coef_ref, x_ref, o_ref):
    x = x_ref[...].astype(jnp.float32)          # (tile_m, W)
    w = x.shape[-1]
    x_next = pltpu.roll(x, w - 1, axis=1)       # x_next[j] = x[(j + 1) % W]
    x_prev = pltpu.roll(x, 1, axis=1)           # x_prev[j] = x[(j - 1) % W]
    y = (coef_ref[0:1, :] * x
         + coef_ref[1:2, :] * x_next
         + coef_ref[2:3, :] * x_prev)
    o_ref[...] = y.astype(o_ref.dtype)


def _rotation_lane_pallas(coef_w, x2d, tile_m):
    m, w = x2d.shape
    x_spec = pl.BlockSpec((tile_m, w), lambda i: (i, 0))
    return pl.pallas_call(
        _rotation_lane_kernel,
        out_shape=jax.ShapeDtypeStruct((m, w), x2d.dtype),
        grid_spec=pltpu.PrefetchScalarGridSpec(
            num_scalar_prefetch=0,
            grid=(pl.cdiv(m, tile_m),),
            in_specs=[pl.BlockSpec((3, w), lambda i: (0, 0)), x_spec],
            out_specs=x_spec,
        ),
        compiler_params=pltpu.CompilerParams(
            dimension_semantics=("parallel",),
            vmem_limit_bytes=_VMEM_LIMIT_BYTES,
        ),
    )(coef_w, x2d)


# ----------------------------------------------------------------------------
# Kernel 2: row blocks x dense block-diagonal rotation matrix (MXU).
# Used when the lane-dense view does not tile exactly (handles the time column
# and any last-dim width without padding or masked wrapper copies).
# ----------------------------------------------------------------------------
def _rotation_matmul_kernel(rot_ref, x_ref, o_ref):
    x = x_ref[...].astype(jnp.float32)
    y = jnp.dot(x, rot_ref[...], preferred_element_type=jnp.float32)
    o_ref[...] = y.astype(o_ref.dtype)


def _rotation_matmul_pallas(rot, x2d, tile_n):
    n, d = x2d.shape
    x_spec = pl.BlockSpec((tile_n, d), lambda i: (i, 0))
    return pl.pallas_call(
        _rotation_matmul_kernel,
        out_shape=jax.ShapeDtypeStruct((n, d), x2d.dtype),
        grid_spec=pltpu.PrefetchScalarGridSpec(
            num_scalar_prefetch=0,
            grid=(pl.cdiv(n, tile_n),),
            in_specs=[pl.BlockSpec((d, d), lambda i: (0, 0)), x_spec],
            out_specs=x_spec,
        ),
        compiler_params=pltpu.CompilerParams(
            dimension_semantics=("parallel",),
            vmem_limit_bytes=_VMEM_LIMIT_BYTES,
        ),
    )(rot, x2d)


# ----------------------------------------------------------------------------
# Forward (wrapper / glue) — jitted so coefficient prep fuses into a few ops.
# ----------------------------------------------------------------------------
def _normalized_cos_sin(rotary_weights, num_dim):
    w32 = rotary_weights.reshape(num_dim).astype(jnp.float32)
    c = w32[0::2]
    s = w32[1::2]
    norm = jnp.maximum(jnp.sqrt(c * c + s * s), 1e-15)   # clamp_min(1e-15)
    return c / norm, s / norm


def _rotation_forward_impl(input_embeddings, rotary_weights, num_dim):
    shape = input_embeddings.shape
    dim = shape[-1]
    if dim != num_dim:
        assert dim - num_dim == 1, "last dim must equal num_dim or num_dim + 1"
        has_time = True
    else:
        has_time = False

    cn, sn = _normalized_cos_sin(rotary_weights, num_dim)
    zeros = jnp.zeros_like(sn)

    total = input_embeddings.size
    g = math.gcd(dim, 128)
    w_lanes = dim * (128 // g)            # lcm(dim, 128): multiple of 128 and of dim

    if w_lanes <= 8192 and total % w_lanes == 0:
        # ------------------ lane-dense path (primary) -------------------------
        a_d = jnp.stack([cn, cn], axis=-1).reshape(num_dim)       # [cn0,cn0,...]
        be_d = jnp.stack([-sn, zeros], axis=-1).reshape(num_dim)  # [-sn0,0,...]
        bo_d = jnp.stack([zeros, sn], axis=-1).reshape(num_dim)   # [0,sn0,...]
        if has_time:
            one = jnp.ones((1,), jnp.float32)
            zero = jnp.zeros((1,), jnp.float32)
            a_d = jnp.concatenate([one, a_d])     # time lane: identity
            be_d = jnp.concatenate([zero, be_d])
            bo_d = jnp.concatenate([zero, bo_d])
        coef = jnp.stack([a_d, be_d, bo_d], axis=0)               # (3, dim)
        coef_w = jnp.tile(coef, (1, w_lanes // dim))              # (3, W)

        m = total // w_lanes
        x2d = input_embeddings.reshape(m, w_lanes)                # contiguous view
        tile_m = _pick_tile_rows(m, w_lanes)
        y2d = _rotation_lane_pallas(coef_w, x2d, tile_m)
        return y2d.reshape(shape)

    if dim <= _MAX_MATMUL_DIM:
        # ------------------ dense rotation matrix on the MXU ------------------
        h = num_dim // 2
        off = 1 if has_time else 0
        p = off + 2 * jnp.arange(h)
        q = p + 1
        rot = jnp.zeros((dim, dim), jnp.float32)
        rot = rot.at[p, p].set(cn)
        rot = rot.at[q, q].set(cn)
        rot = rot.at[q, p].set(-sn)
        rot = rot.at[p, q].set(sn)
        if has_time:
            rot = rot.at[0, 0].set(1.0)

        n = total // dim
        x2d = input_embeddings.reshape(n, dim)
        tile_n = _pick_tile_rows(n, dim)
        y2d = _rotation_matmul_pallas(rot, x2d, tile_n)
        return y2d.reshape(shape)

    # TODO(synk): very large feature dims that neither tile lane-dense nor fit a
    # dense (dim, dim) rotation matrix fall back to plain JAX.
    x2d = input_embeddings.reshape(-1, dim).astype(jnp.float32)
    if has_time:
        t = x2d[:, 0:1]
        xr = x2d[:, 1:]
    else:
        t = None
        xr = x2d
    xv = xr.reshape(xr.shape[0], -1, 2)
    ye = cn * xv[:, :, 0] - sn * xv[:, :, 1]
    yo = sn * xv[:, :, 0] + cn * xv[:, :, 1]
    yr = jnp.stack([ye, yo], axis=-1).reshape(xr.shape)
    if t is not None:
        yr = jnp.concatenate([t, yr], axis=-1)
    return yr.astype(input_embeddings.dtype).reshape(shape)


rotation_forward = jax.jit(_rotation_forward_impl, static_argnums=(2,))


# ----------------------------------------------------------------------------
# Parameter init (mirrors Rotation.__init__ with random_init=True)
# ----------------------------------------------------------------------------
def init_rotary_weights(key, num_dim):
    num_angles = num_dim // 2
    init_angles = jax.random.normal(key, (1, num_angles), dtype=jnp.float32) * math.pi
    w = jnp.zeros((1, num_dim), dtype=jnp.float32)
    w = w.at[:, ::2].set(jnp.cos(init_angles))
    w = w.at[:, 1::2].set(jnp.sin(init_angles))
    return w


# Pure-JAX reference (mirrors the torch givens_rotations semantics).
def _reference_forward(x, rotary_weights, num_dim):
    shape = x.shape
    dim = shape[-1]
    x2 = x.reshape(-1, dim).astype(jnp.float32)
    if dim != num_dim:
        time_axis = x2[:, 0:1]
        xr = x2[:, 1:]
    else:
        time_axis = None
        xr = x2
    n = xr.shape[0]
    r = jnp.broadcast_to(rotary_weights.astype(jnp.float32), xr.shape).reshape(n, -1, 2)
    r = r / jnp.maximum(jnp.linalg.norm(r, axis=-1, keepdims=True), 1e-15)
    xv = xr.reshape(n, -1, 2)
    swapped = jnp.concatenate([-xv[:, :, 1:], xv[:, :, 0:1]], axis=-1)
    y = r[:, :, 0:1] * xv + r[:, :, 1:] * swapped
    y = y.reshape(n, -1)
    if time_axis is not None:
        y = jnp.concatenate([time_axis, y], axis=-1)
    return y.reshape(shape)


if __name__ == "__main__":
    key = jax.random.PRNGKey(0)
    k_w, k_w2, k_x1, k_x2, k_x3, k_x4 = jax.random.split(key, 6)

    num_dim = 32
    rotary_weights = init_rotary_weights(k_w, num_dim)

    # Case 1: dim == num_dim (lane-dense Pallas path, f32).
    x1 = jax.random.normal(k_x1, (2, 8, num_dim), dtype=jnp.float32)
    y1 = jax.block_until_ready(rotation_forward(x1, rotary_weights, num_dim))
    ref1 = _reference_forward(x1, rotary_weights, num_dim)
    assert y1.shape == x1.shape and y1.dtype == x1.dtype
    assert jnp.allclose(y1, ref1, atol=1e-5, rtol=1e-5)

    # Case 2: dim == num_dim + 1 (time column handled in-kernel, MXU path).
    x2 = jax.random.normal(k_x2, (2, 8, num_dim + 1), dtype=jnp.float32)
    y2 = jax.block_until_ready(rotation_forward(x2, rotary_weights, num_dim))
    ref2 = _reference_forward(x2, rotary_weights, num_dim)
    assert y2.shape == x2.shape and y2.dtype == x2.dtype
    assert jnp.allclose(y2, ref2, atol=1e-5, rtol=1e-5)

    # Case 3: bf16 input, dim == num_dim (dtype preserved through the kernel).
    x3 = jax.random.normal(k_x3, (4, 8, num_dim), dtype=jnp.float32).astype(jnp.bfloat16)
    y3 = jax.block_until_ready(rotation_forward(x3, rotary_weights, num_dim))
    ref3 = _reference_forward(x3.astype(jnp.float32), rotary_weights, num_dim)
    assert y3.shape == x3.shape and y3.dtype == jnp.bfloat16
    assert jnp.allclose(y3.astype(jnp.float32), ref3, atol=5e-2, rtol=5e-2)

    # Case 4: feature dim that does not divide 128 (rows interleave inside W).
    num_dim2 = 96
    rotary_weights2 = init_rotary_weights(k_w2, num_dim2)
    x4 = jax.random.normal(k_x4, (4, 16, num_dim2), dtype=jnp.float32)
    y4 = jax.block_until_ready(rotation_forward(x4, rotary_weights2, num_dim2))
    ref4 = _reference_forward(x4, rotary_weights2, num_dim2)
    assert y4.shape == x4.shape and y4.dtype == x4.dtype
    assert jnp.allclose(y4, ref4, atol=1e-5, rtol=1e-5)

    print("KERNEL_OK")
</pallas_src>

<mosaic_0001>
module attributes {stable_mosaic.version = 11 : i64} {
  func.func @_rotation_lane_kernel(%arg0: i32, %arg1: memref<3x128xf32, #tpu.memory_space<vmem>>, %arg2: memref<4x128xf32, #tpu.memory_space<vmem>>, %arg3: memref<4x128xf32, #tpu.memory_space<vmem>>) attributes {dimension_semantics = [#tpu.dimension_semantics<parallel>], iteration_bounds = array<i64: 1>, scalar_prefetch = 0 : i64, scratch_operands = 0 : i64, tpu.core_type = #tpu.core_type<tc>, window_params = [{pipeline_mode = #tpu.pipeline_mode<synchronous>, transform_indices = @transform_0, window_bounds = array<i64: 3, 128>}, {transform_indices = @transform_1, window_bounds = array<i64: 4, 128>}, {transform_indices = @transform_2, window_bounds = array<i64: 4, 128>}]} {
    %c0 = arith.constant 0 : index
    %c0_0 = arith.constant 0 : index
    %0 = vector.load %arg2[%c0, %c0_0] : memref<4x128xf32, #tpu.memory_space<vmem>>, vector<4x128xf32>
    %c127_i32 = arith.constant 127 : i32
    %1 = tpu.dynamic_rotate %0 by %c127_i32 dim 1 : vector<4x128xf32>, i32 -> vector<4x128xf32>
    %c1_i32 = arith.constant 1 : i32
    %2 = tpu.dynamic_rotate %0 by %c1_i32 dim 1 : vector<4x128xf32>, i32 -> vector<4x128xf32>
    %c0_1 = arith.constant 0 : index
    %c0_2 = arith.constant 0 : index
    %3 = vector.load %arg1[%c0_1, %c0_2] : memref<3x128xf32, #tpu.memory_space<vmem>>, vector<1x128xf32>
    %4 = vector.broadcast %3 : vector<1x128xf32> to vector<4x128xf32>
    %5 = arith.mulf %4, %0 : vector<4x128xf32>
    %c1 = arith.constant 1 : index
    %c0_3 = arith.constant 0 : index
    %6 = vector.load %arg1[%c1, %c0_3] : memref<3x128xf32, #tpu.memory_space<vmem>>, vector<1x128xf32>
    %7 = vector.broadcast %6 : vector<1x128xf32> to vector<4x128xf32>
    %8 = arith.mulf %7, %1 : vector<4x128xf32>
    %9 = arith.addf %5, %8 : vector<4x128xf32>
    %c2 = arith.constant 2 : index
    %c0_4 = arith.constant 0 : index
    %10 = vector.load %arg1[%c2, %c0_4] : memref<3x128xf32, #tpu.memory_space<vmem>>, vector<1x128xf32>
    %11 = vector.broadcast %10 : vector<1x128xf32> to vector<4x128xf32>
    %12 = arith.mulf %11, %2 : vector<4x128xf32>
    %13 = arith.addf %9, %12 : vector<4x128xf32>
    %c0_5 = arith.constant 0 : index
    %c0_6 = arith.constant 0 : index
    %14 = vector.load %arg3[%c0_5, %c0_6] : memref<4x128xf32, #tpu.memory_space<vmem>>, vector<4x128xf32>
    tpu.vector_store %arg3[%c0_5, %c0_6], %13 {strides = array<i32>} : memref<4x128xf32, #tpu.memory_space<vmem>>, vector<4x128xf32>,
    return
  }
  func.func @transform_0(%arg0: i32) -> (i32, i32) {
    %c0_i32 = arith.constant 0 : i32
    %c0_i32_0 = arith.constant 0 : i32
    %c0_i32_1 = arith.constant 0 : i32
    return %c0_i32, %c0_i32_0 : i32, i32
  }
  func.func @transform_1(%arg0: i32) -> (i32, i32) {
    %c0_i32 = arith.constant 0 : i32
    %c0_i32_0 = arith.constant 0 : i32
    return %arg0, %c0_i32 : i32, i32
  }
  func.func @transform_2(%arg0: i32) -> (i32, i32) {
    %c0_i32 = arith.constant 0 : i32
    %c0_i32_0 = arith.constant 0 : i32
    return %arg0, %c0_i32 : i32, i32
  }
}

</mosaic_0001>

<llo_original>
// kernel: tile.9
$region0: #{tile.9}
  %s0 = inlined_call_operand.vmem [shape: f32[3,4,32], index: 0, kind: input, shape index: {}]
  %s1 = inlined_call_operand.vmem [shape: f32[3,128], index: 1, kind: output, shape index: {}]
  $region1: #{tile.9} parent=0
    #allocation0 [shape = 'u8[4096]{0}', space=vmem, size = 0x1000, scoped, tag = 'scoped mem for output reshape']
    #allocation1 [shape = 'u8[12288]{0}', space=vmem, size = 0x3000, scoped, tag = 'scoped mem for input reshape']
    %s3 = ssub.s32 16, 1
    %s4 = scalar_lea.vmem %s0, 8
    %v5 = vld [vmem:[%s4] sm:%s3]
    %s6 = scalar_lea.vmem [#allocation1], 16
    %7 = vst [vmem:[%s6] sm:%s3] %v5
    %s8 = scalar_lea.vmem %s0, 4
    %v9 = vld [vmem:[%s8] sm:%s3]
    %s10 = scalar_lea.vmem [#allocation1], 8
    %11 = vst [vmem:[%s10] sm:%s3] %v9
    %v12 = vld [vmem:[%s0] sm:%s3]
    %13 = vst [vmem:[#allocation1] sm:%s3] %v12
    %v14 = vld [vmem:[#allocation1] ss:$8 sm:$0x7]
    %vm15 = vcmask 261120
    %16 = vst.msk [vmem:[#allocation0] sm:$0x7] %vm15, %v14
    %s17 = scalar_lea.vmem [#allocation1], 3
    %v18 = vld [vmem:[%s17] ss:$8 sm:$0x7]
    %19 = vrot.lane.b32.xlu0 %v18, 96
    %v20 = vpop.permute.xlu0 %19
    %vm21 = vcmask 1048320
    %22 = vst.msk [vmem:[#allocation0] sm:$0x7] %vm21, %v20
    %s23 = scalar_lea.vmem [#allocation1], 2
    %v24 = vld [vmem:[%s23] ss:$8 sm:$0x7]
    %25 = vrot.lane.b32.xlu0 %v24, 64
    %v26 = vpop.permute.xlu0 %25
    %vm27 = vcmask 785920
    %28 = vst.msk [vmem:[#allocation0] sm:$0x7] %vm27, %v26
    %s29 = scalar_lea.vmem [#allocation1], 1
    %v30 = vld [vmem:[%s29] ss:$8 sm:$0x7]
    %31 = vrot.lane.b32.xlu0 %v30, 32
    %v32 = vpop.permute.xlu0 %31
    %vm33 = vcmask 523520
    %34 = vst.msk [vmem:[#allocation0] sm:$0x7] %vm33, %v32
    %s36 = ssub.s32 16, 1
    %v37 = vld [vmem:[#allocation0] sm:%s36]
    %s39 = ssub.s32 16, 1
    %40 = vst [vmem:[%s1] sm:%s39] %v37

// kernel: _rotation_forward_impl.1
$region0: #{_rotation_forward_impl.1}
  #allocation0 [shape = 'u32[]', space=smem, size = 0x4, offset = 0x4, fixed_abs, tag = 'smem constant byte address 0x4 - core index']
  #allocation1 [shape = 'u32[72,128]{1,0:T(1,128)}', space=vmem, size = 0x9000, scoped, tag = 'internal scratch']
  %s0 = inlined_call_operand.vmem [shape: f32[3,128], index: 0, kind: input, shape index: {}]
  %s1 = inlined_call_operand.vmem [shape: f32[4,128], index: 1, kind: input, shape index: {}]
  %s2 = inlined_call_operand.vmem [shape: f32[4,128], index: 2, kind: output, shape index: {}]
  %s3 = sld [smem:[#allocation0]]
  $region18: #{_rotation_forward_impl.1} parent=0
    _
  %s5 = ssub.s32 1, %s3
  %s6 = scalar_select 0, %s5, %s3
  // Predicated region
  $region2: #{_rotation_forward_impl.1} parent=0 // pred_check
    _
  $region3: #{_rotation_forward_impl.1} parent=0 // pred_check_branch
    %8 = sbr.rel (0) target = $region5
  $region4: #{_rotation_forward_impl.1} parent=0 // pred_region
    _
  $region5: #{_rotation_forward_impl.1} parent=0 // pred_fallthru
    _
  // Predicated region
  $region6: #{_rotation_forward_impl.1} parent=0 // pred_check
    _
  $region7: #{_rotation_forward_impl.1} parent=0 // pred_check_branch
    %10 = sbr.rel (0) target = $region9
  $region8: #{_rotation_forward_impl.1} parent=0 // pred_region
    _
  $region9: #{_rotation_forward_impl.1} parent=0 // pred_fallthru
    _
  %v11 = vld [vmem:[%s1] sm:$0xf]
  %12 = vrot.lane.b32.xlu0 %v11, 127
  %v13 = vpop.permute.xlu0 %12
  %14 = vrot.lane.b32.xlu0 %v11, 1
  %v15 = vpop.permute.xlu0 %14
  %v16 = vld [vmem:[%s0] sm:$0x1]
  %v17 = vperm.slane %v16, 0
  %v18 = vmul.f32 %v17, %v11
  %v19 = vld [vmem:[%s0 + $0x1] sm:$0x1]
  %v20 = vperm.slane %v19, 0
  %v21 = vmul.f32 %v20, %v13
  %v22 = vadd.f32 %v18, %v21
  %v23 = vld [vmem:[%s0 + $0x2] sm:$0x1]
  %v24 = vperm.slane %v23, 0
  %v25 = vmul.f32 %v24, %v15
  %v26 = vadd.f32 %v22, %v25
  %27 = vst [vmem:[%s2] sm:$0xf] %v26
  // Predicated region
  $region10: #{_rotation_forward_impl.1} parent=0 // pred_check
    _
  $region11: #{_rotation_forward_impl.1} parent=0 // pred_check_branch
    %29 = sbr.rel (0) target = $region13
  $region12: #{_rotation_forward_impl.1} parent=0 // pred_region
    _
  $region13: #{_rotation_forward_impl.1} parent=0 // pred_fallthru
    _
  // Predicated region
  $region14: #{_rotation_forward_impl.1} parent=0 // pred_check
    _
  $region15: #{_rotation_forward_impl.1} parent=0 // pred_check_branch
    %31 = sbr.rel (0) target = $region17
  $region16: #{_rotation_forward_impl.1} parent=0 // pred_region
    _
  $region17: #{_rotation_forward_impl.1} parent=0 // pred_fallthru
    _

</llo_original>
